<compile_context>
chip_gen: v7x
topology: tpu7x:2x2x1
jax: 0.10.0
libtpu: 0.0.40
codegen_flags: <defaults>
</compile_context>

<pallas_src>
import functools

import numpy as np
import jax
import jax.numpy as jnp
from jax import lax
from jax.experimental import pallas as pl
from jax.experimental.pallas import tpu as pltpu

# ----------------------------------------------------------------------------
# ChangeFormerV4 hyper-parameters
# ----------------------------------------------------------------------------
EMBED_DIMS = [32, 64, 128, 320, 512]
DEPTHS = [3, 3, 4, 12, 3]
NUM_HEADS = [2, 2, 4, 8, 16]
MLP_RATIOS = [2, 2, 2, 2, 2]
SR_RATIOS = [8, 4, 2, 1, 1]
PATCH_SIZES = [7, 3, 3, 3, 3]
PATCH_PADS = [3, 1, 1, 1, 1]
EMBEDDING_DIM = 256
OUTPUT_NC = 2
INPUT_NC = 3
_PRED_PAD = 128          # lane-dense padded width for the 2-channel heads

# VMEM budget: ~3/4 of physical (v5e/v6e: 128MiB -> 96MiB cap, v7x: 64 -> 48MiB)
try:
    _VMEM_PHYS = int(pltpu.get_tpu_info().vmem_capacity_bytes)
except Exception:                                            # pragma: no cover
    _VMEM_PHYS = 64 * 1024 * 1024
_VMEM_LIMIT = int(min(96 * 1024 * 1024, _VMEM_PHYS * 3 // 4))


def _pick_tk(k):
    if k > 2048:
        for t in (512, 256, 128):
            if k % t == 0:
                return t
    return k                       # full-K block, single reduction step


def _pick_tm(m, k, n):
    cands = [t for t in (1024, 512, 256, 128) if m % t == 0]
    if not cands:
        return m                   # full-dim block (small / odd M)
    for t in cands:                # largest tile fitting the VMEM budget
        if t * k * 8 + t * n * 16 < _VMEM_LIMIT * 3 // 4:
            return t
    return cands[-1]


def _pick_tn(n, nm):
    # Give small-M matmuls a 2nd parallel grid step (v7x has 2 TensorCores).
    if nm == 1 and n % 256 == 0:
        return n // 2
    return n


# ----------------------------------------------------------------------------
# Fused matmul kernel:  out = epilogue( [LN(a)] @ b + bias )
#   epilogue: [relu] -> [*scale + shift (per out-channel)] -> [*res_scale + res]
# MXU operands are bf16, accumulation f32.
# ----------------------------------------------------------------------------
def _make_mm_kernel(act, has_bias, has_ln, has_aff, has_res, res_scale,
                    single_k):
    def kernel(*refs):
        idx = 0
        a_ref = refs[idx]; idx += 1
        b_ref = refs[idx]; idx += 1
        bias_ref = None
        if has_bias:
            bias_ref = refs[idx]; idx += 1
        if has_ln:
            g_ref, be_ref = refs[idx], refs[idx + 1]; idx += 2
        if has_aff:
            sc_ref, sh_ref = refs[idx], refs[idx + 1]; idx += 2
        if has_res:
            r_ref = refs[idx]; idx += 1
        o_ref = refs[idx]; idx += 1
        acc_ref = refs[idx] if not single_k else None

        a = a_ref[...]
        if has_ln:                               # pre-norm prologue (full K)
            a32 = a.astype(jnp.float32)
            mu = jnp.mean(a32, axis=-1, keepdims=True)
            xc = a32 - mu
            var = jnp.mean(xc * xc, axis=-1, keepdims=True)
            a = xc * lax.rsqrt(var + 1e-5) * g_ref[...] + be_ref[...]
        part = jnp.dot(a.astype(jnp.bfloat16), b_ref[...].astype(jnp.bfloat16),
                       preferred_element_type=jnp.float32)

        def finalize(y):
            if has_bias:
                y = y + bias_ref[...]
            if act == "relu":
                y = jnp.maximum(y, 0.0)
            if has_aff:                          # folded eval-BatchNorm affine
                y = y * sc_ref[...] + sh_ref[...]
            if has_res:                          # fused residual add
                y = y * res_scale + r_ref[...].astype(jnp.float32)
            o_ref[...] = y.astype(o_ref.dtype)

        if single_k:
            finalize(part)
        else:
            k = pl.program_id(2)

            @pl.when(k == 0)
            def _():
                acc_ref[...] = jnp.zeros_like(acc_ref)

            acc_ref[...] += part

            @pl.when(k == pl.num_programs(2) - 1)
            def _():
                finalize(acc_ref[...])

    return kernel


@functools.partial(jax.jit, static_argnames=("act", "res_scale", "out_dtype"))
def _fused_matmul(a, b, bias, ln, affine, residual, *, act, res_scale,
                  out_dtype):
    M, K = a.shape
    N = b.shape[1]
    TK = K if ln is not None else _pick_tk(K)    # LN prologue needs full rows
    TM = _pick_tm(M, TK, N)
    nm = M // TM
    TN = _pick_tn(N, nm)
    nn = N // TN
    nk = K // TK
    single_k = nk == 1

    if single_k:
        grid = (nm, nn)
        dims = ("parallel", "parallel")

        def im_a(i, j): return (i, 0)
        def im_b(i, j): return (0, j)
        def im_vn(i, j): return (0, j)
        def im_vk(i, j): return (0, 0)
        def im_o(i, j): return (i, j)
        scratch = []
    else:
        grid = (nm, nn, nk)
        dims = ("parallel", "parallel", "arbitrary")

        def im_a(i, j, k): return (i, k)
        def im_b(i, j, k): return (k, j)
        def im_vn(i, j, k): return (0, j)
        def im_vk(i, j, k): return (0, 0)
        def im_o(i, j, k): return (i, j)
        scratch = [pltpu.VMEM((TM, TN), jnp.float32)]

    in_specs = [pl.BlockSpec((TM, TK), im_a),
                pl.BlockSpec((TK, TN), im_b)]
    inputs = [a, b]
    if bias is not None:
        in_specs.append(pl.BlockSpec((1, TN), im_vn))
        inputs.append(bias.reshape(1, N))
    if ln is not None:
        g, be = ln
        in_specs += [pl.BlockSpec((1, TK), im_vk),
                     pl.BlockSpec((1, TK), im_vk)]
        inputs += [g.reshape(1, K), be.reshape(1, K)]
    if affine is not None:
        sc, sh = affine
        in_specs += [pl.BlockSpec((1, TN), im_vn),
                     pl.BlockSpec((1, TN), im_vn)]
        inputs += [sc.reshape(1, N), sh.reshape(1, N)]
    if residual is not None:
        in_specs.append(pl.BlockSpec((TM, TN), im_o))
        inputs.append(residual)

    kernel = _make_mm_kernel(act, bias is not None, ln is not None,
                             affine is not None, residual is not None,
                             res_scale, single_k)
    return pl.pallas_call(
        kernel,
        out_shape=jax.ShapeDtypeStruct((M, N), out_dtype),
        grid=grid,
        in_specs=in_specs,
        out_specs=pl.BlockSpec((TM, TN), im_o),
        scratch_shapes=scratch,
        compiler_params=pltpu.CompilerParams(
            dimension_semantics=dims, vmem_limit_bytes=_VMEM_LIMIT),
    )(*inputs)


def fused_matmul(a, b, bias=None, act="none", residual=None, res_scale=1.0,
                 ln=None, affine=None, out_dtype=jnp.float32):
    return _fused_matmul(a, b, bias, ln, affine, residual, act=act,
                         res_scale=float(res_scale), out_dtype=out_dtype)


# ----------------------------------------------------------------------------
# Standalone LayerNorm (only where its output feeds >1 consumer)
# ----------------------------------------------------------------------------
def _layernorm_kernel(x_ref, g_ref, b_ref, o_ref, *, eps):
    x = x_ref[...].astype(jnp.float32)
    mu = jnp.mean(x, axis=-1, keepdims=True)
    xc = x - mu
    var = jnp.mean(xc * xc, axis=-1, keepdims=True)
    o_ref[...] = (xc * lax.rsqrt(var + eps) * g_ref[...] + b_ref[...]).astype(
        o_ref.dtype)


@jax.jit
def pallas_layernorm(x2, gamma, beta):
    M, C = x2.shape
    TM = _pick_tm(M, C, C)
    return pl.pallas_call(
        functools.partial(_layernorm_kernel, eps=1e-5),
        out_shape=jax.ShapeDtypeStruct((M, C), jnp.float32),
        grid=(M // TM,),
        in_specs=[pl.BlockSpec((TM, C), lambda i: (i, 0)),
                  pl.BlockSpec((1, C), lambda i: (0, 0)),
                  pl.BlockSpec((1, C), lambda i: (0, 0))],
        out_specs=pl.BlockSpec((TM, C), lambda i: (i, 0)),
        compiler_params=pltpu.CompilerParams(
            dimension_semantics=("parallel",), vmem_limit_bytes=_VMEM_LIMIT),
    )(x2, gamma.reshape(1, C), beta.reshape(1, C))


# ----------------------------------------------------------------------------
# Depthwise 3x3 conv (stride 1, pad 1) with fused GELU.  One image per grid
# step; zero padding is done in-kernel in a VMEM scratch (no HBM pad pass).
# ----------------------------------------------------------------------------
def _dwconv_gelu_kernel(x_ref, w_ref, b_ref, o_ref, xp_ref, *, H, W):
    xp_ref[...] = jnp.zeros_like(xp_ref)
    xp_ref[1:H + 1, 1:W + 1, :] = x_ref[0].astype(xp_ref.dtype)
    x = xp_ref[...].astype(jnp.float32)          # (H+2, W+2, C)
    w = w_ref[...]                               # (9, C) f32
    acc = None
    t = 0
    for i in range(3):
        for j in range(3):
            tap = x[i:i + H, j:j + W, :] * w[t].reshape(1, 1, -1)
            acc = tap if acc is None else acc + tap
            t += 1
    y = acc + b_ref[...].reshape(1, 1, -1)
    # TODO(synk): PyTorch nn.GELU defaults to the exact erf formulation; the
    # tanh approximation used here differs by ~1e-3.
    c = 0.7978845608028654                       # sqrt(2/pi)
    g = 0.5 * y * (1.0 + jnp.tanh(c * (y + 0.044715 * y * y * y)))
    o_ref[0] = g.astype(o_ref.dtype)


@jax.jit
def dwconv3x3_gelu(x, w9, bias):
    B, H, W, C = x.shape
    # TODO(synk): strip-tile over H (halo'd) for large maps so the block fits
    # v7x's 64 MiB VMEM; whole-image blocks are fine at these test sizes.
    return pl.pallas_call(
        functools.partial(_dwconv_gelu_kernel, H=H, W=W),
        out_shape=jax.ShapeDtypeStruct((B, H, W, C), x.dtype),
        grid=(B,),
        in_specs=[pl.BlockSpec((1, H, W, C), lambda b: (b, 0, 0, 0)),
                  pl.BlockSpec((9, C), lambda b: (0, 0)),
                  pl.BlockSpec((1, C), lambda b: (0, 0))],
        out_specs=pl.BlockSpec((1, H, W, C), lambda b: (b, 0, 0, 0)),
        scratch_shapes=[pltpu.VMEM((H + 2, W + 2, C), x.dtype)],
        compiler_params=pltpu.CompilerParams(
            dimension_semantics=("parallel",), vmem_limit_bytes=_VMEM_LIMIT),
    )(x, w9, bias.reshape(1, C))


# ----------------------------------------------------------------------------
# Attention: one image per grid step, heads sliced inside the kernel from the
# (B, N, heads*d) layout -- no HBM head-split transposes.  Softmax exact, f32.
# ----------------------------------------------------------------------------
def _attn_heads(q, k, v, num_heads, scale, out_dtype):
    C = q.shape[-1]
    d = C // num_heads
    outs = []
    for h in range(num_heads):
        qh = q[:, h * d:(h + 1) * d]
        kh = k[:, h * d:(h + 1) * d]
        vh = v[:, h * d:(h + 1) * d]
        s = lax.dot_general(qh, kh, (((1,), (1,)), ((), ())),
                            preferred_element_type=jnp.float32) * scale
        s = s - jnp.max(s, axis=-1, keepdims=True)
        p = jnp.exp(s)
        p = p / jnp.sum(p, axis=-1, keepdims=True)
        outs.append(jnp.dot(p.astype(vh.dtype), vh,
                            preferred_element_type=jnp.float32))
    return jnp.concatenate(outs, axis=-1).astype(out_dtype)


def _attn_qkv_kernel(qkv_ref, o_ref, *, num_heads, scale, C):
    x = qkv_ref[0]
    o_ref[0] = _attn_heads(x[:, :C], x[:, C:2 * C], x[:, 2 * C:],
                           num_heads, scale, o_ref.dtype)


def _attn_sep_kernel(q_ref, kv_ref, o_ref, *, num_heads, scale, C):
    q = q_ref[0]
    kv = kv_ref[0]
    o_ref[0] = _attn_heads(q, kv[:, :C], kv[:, C:], num_heads, scale,
                           o_ref.dtype)


# TODO(synk): add flash-style kv tiling for the sr_ratio==1 stages at large N
# so the (N, N) score tile never exceeds v7x VMEM at high resolutions.
@functools.partial(jax.jit, static_argnames=("num_heads", "scale"))
def attention_fused_qkv(qkv, num_heads, scale):
    B, N, C3 = qkv.shape
    C = C3 // 3
    return pl.pallas_call(
        functools.partial(_attn_qkv_kernel, num_heads=num_heads, scale=scale,
                          C=C),
        out_shape=jax.ShapeDtypeStruct((B, N, C), qkv.dtype),
        grid=(B,),
        in_specs=[pl.BlockSpec((1, N, C3), lambda b: (b, 0, 0))],
        out_specs=pl.BlockSpec((1, N, C), lambda b: (b, 0, 0)),
        compiler_params=pltpu.CompilerParams(
            dimension_semantics=("parallel",), vmem_limit_bytes=_VMEM_LIMIT),
    )(qkv)


@functools.partial(jax.jit, static_argnames=("num_heads", "scale"))
def attention_sep(q, kv, num_heads, scale):
    B, N, C = q.shape
    M = kv.shape[1]
    return pl.pallas_call(
        functools.partial(_attn_sep_kernel, num_heads=num_heads, scale=scale,
                          C=C),
        out_shape=jax.ShapeDtypeStruct((B, N, C), q.dtype),
        grid=(B,),
        in_specs=[pl.BlockSpec((1, N, C), lambda b: (b, 0, 0)),
                  pl.BlockSpec((1, M, 2 * C), lambda b: (b, 0, 0))],
        out_specs=pl.BlockSpec((1, N, C), lambda b: (b, 0, 0)),
        compiler_params=pltpu.CompilerParams(
            dimension_semantics=("parallel",), vmem_limit_bytes=_VMEM_LIMIT),
    )(q, kv)


# ----------------------------------------------------------------------------
# Tap conv: stride-1 conv expressed as a sum of shifted-window MXU matmuls on
# a halo'd whole-image VMEM block (no im2col HBM amplification).  Epilogue:
# bias -> [relu] -> [BN affine] -> [*res_scale + residual].
# ----------------------------------------------------------------------------
def _tapconv_kernel(*refs, taps, OH, OW, act, has_aff, has_res, res_scale):
    idx = 0
    x_ref = refs[idx]; idx += 1
    w_ref = refs[idx]; idx += 1
    b_ref = refs[idx]; idx += 1
    if has_aff:
        sc_ref, sh_ref = refs[idx], refs[idx + 1]; idx += 2
    if has_res:
        r_ref = refs[idx]; idx += 1
    o_ref = refs[idx]

    x = x_ref[0]                                  # (Hp, Wp, Cin) padded
    Cin = x.shape[-1]
    acc = None
    for t, (dh, dw) in enumerate(taps):
        xs = x[dh:dh + OH, dw:dw + OW, :].reshape(OH * OW, Cin)
        term = jnp.dot(xs.astype(jnp.bfloat16), w_ref[t],
                       preferred_element_type=jnp.float32)
        acc = term if acc is None else acc + term
    Cout = acc.shape[-1]
    y = acc + b_ref[...]
    if act == "relu":
        y = jnp.maximum(y, 0.0)
    if has_aff:
        y = y * sc_ref[...] + sh_ref[...]
    if has_res:
        y = y * res_scale + r_ref[0].reshape(OH * OW, Cout).astype(jnp.float32)
    o_ref[0] = y.reshape(OH, OW, Cout).astype(o_ref.dtype)


@functools.partial(jax.jit, static_argnames=("taps", "oh", "ow", "act",
                                             "res_scale", "out_dtype"))
def _tapconv_call(xp, w_stack, bias, affine, residual, *, taps, oh, ow, act,
                  res_scale, out_dtype):
    B, Hp, Wp, Cin = xp.shape
    T, _, Cout = w_stack.shape
    in_specs = [pl.BlockSpec((1, Hp, Wp, Cin), lambda b: (b, 0, 0, 0)),
                pl.BlockSpec((T, Cin, Cout), lambda b: (0, 0, 0)),
                pl.BlockSpec((1, Cout), lambda b: (0, 0))]
    inputs = [xp, w_stack, bias.reshape(1, Cout)]
    if affine is not None:
        sc, sh = affine
        in_specs += [pl.BlockSpec((1, Cout), lambda b: (0, 0)),
                     pl.BlockSpec((1, Cout), lambda b: (0, 0))]
        inputs += [sc.reshape(1, Cout), sh.reshape(1, Cout)]
    if residual is not None:
        in_specs.append(pl.BlockSpec((1, oh, ow, Cout), lambda b: (b, 0, 0, 0)))
        inputs.append(residual)
    kernel = functools.partial(_tapconv_kernel, taps=taps, OH=oh, OW=ow,
                               act=act, has_aff=affine is not None,
                               has_res=residual is not None,
                               res_scale=res_scale)
    return pl.pallas_call(
        kernel,
        out_shape=jax.ShapeDtypeStruct((B, oh, ow, Cout), out_dtype),
        grid=(B,),
        in_specs=in_specs,
        out_specs=pl.BlockSpec((1, oh, ow, Cout), lambda b: (b, 0, 0, 0)),
        compiler_params=pltpu.CompilerParams(
            dimension_semantics=("parallel",), vmem_limit_bytes=_VMEM_LIMIT),
    )(*inputs)


def _tap_fits_vmem(Hp, Wp, Cin, oh, ow, Cout, T, xbytes, has_res):
    fp = 2 * Hp * Wp * Cin * xbytes               # double-buffered input block
    fp += T * Cin * Cout * 2                      # bf16 weights
    fp += (4 if has_res else 2) * oh * ow * Cout * 4
    fp += T * oh * ow * (Cin * 2 + Cout * 4)      # in-kernel tap temporaries
    return fp < _VMEM_LIMIT * 3 // 4


def tap_conv(xp, w_stack, bias, taps, oh, ow, act="none", affine=None,
             residual=None, res_scale=1.0, out_dtype=jnp.float32):
    """xp already padded for the given taps; w_stack: (T, Cin, Cout) bf16."""
    B, Hp, Wp, Cin = xp.shape
    T, _, Cout = w_stack.shape
    if _tap_fits_vmem(Hp, Wp, Cin, oh, ow, Cout, T, xp.dtype.itemsize,
                      residual is not None):
        return _tapconv_call(xp, w_stack, bias, affine, residual, taps=taps,
                             oh=oh, ow=ow, act=act,
                             res_scale=float(res_scale), out_dtype=out_dtype)
    # TODO(synk): strip-tile the halo'd conv over H for very large maps; the
    # im2col fallback below keeps correctness at any size.
    cols = [xp[:, dh:dh + oh, dw:dw + ow, :] for (dh, dw) in taps]
    a = jnp.concatenate(cols, axis=-1).reshape(B * oh * ow, T * Cin)
    res2 = None if residual is None else residual.reshape(B * oh * ow, Cout)
    y = fused_matmul(a, w_stack.reshape(T * Cin, Cout), bias, act=act,
                     affine=affine, residual=res2, res_scale=res_scale,
                     out_dtype=out_dtype)
    return y.reshape(B, oh, ow, Cout)


_TAPS_3x3 = tuple((i, j) for i in range(3) for j in range(3))


def conv3x3(x, w_stack, bias, act="none", affine=None, residual=None,
            res_scale=1.0, out_dtype=jnp.float32):
    """Same-padded 3x3 conv, NHWC; w_stack: (9, Cin, Cout) tap-major."""
    B, H, W, _ = x.shape
    xp = jnp.pad(x, ((0, 0), (1, 1), (1, 1), (0, 0)))
    return tap_conv(xp, w_stack, bias, _TAPS_3x3, H, W, act=act, affine=affine,
                    residual=residual, res_scale=res_scale, out_dtype=out_dtype)


# ----------------------------------------------------------------------------
# Strided convs (patch embeddings, sr conv): im2col + fused matmul.
# ----------------------------------------------------------------------------
def conv2d_im2col(x, w, b, stride=1, padding=0, act="none",
                  out_dtype=jnp.float32):
    """x:(B,H,W,Cin) NHWC, w:(KH,KW,Cin,Cout) (bf16), b:(Cout,)."""
    B, H, W, Cin = x.shape
    KH, KW, _, Cout = w.shape
    OH = (H + 2 * padding - KH) // stride + 1
    OW = (W + 2 * padding - KW) // stride + 1
    if padding:
        x = jnp.pad(x, ((0, 0), (padding, padding), (padding, padding), (0, 0)))
    if KH == 1 and KW == 1 and stride == 1:
        a = x.reshape(B * OH * OW, Cin)
    elif stride == KH and stride == KW and padding == 0 \
            and H % KH == 0 and W % KW == 0:
        # non-overlapping patches (sr conv): pure reshape, no slicing
        a = x.reshape(B, OH, KH, OW, KW, Cin).transpose(0, 1, 3, 2, 4, 5)
        a = a.reshape(B * OH * OW, KH * KW * Cin)
    else:
        cols = [x[:, i:i + stride * OH:stride, j:j + stride * OW:stride, :]
                for i in range(KH) for j in range(KW)]
        a = jnp.concatenate(cols, axis=-1).reshape(B * OH * OW, KH * KW * Cin)
    y = fused_matmul(a, w.reshape(KH * KW * Cin, Cout), b, act=act,
                     out_dtype=out_dtype)
    return y.reshape(B, OH, OW, Cout)


# ----------------------------------------------------------------------------
# ConvTranspose2d(k=4, s=2, p=1) as 4 sub-pixel 2x2 tap convs.
# ----------------------------------------------------------------------------
_UP_TAPS = (((0, 0), (0, 1), (1, 0), (1, 1)),     # (r=0, s=0)
            ((0, 1), (0, 2), (1, 1), (1, 2)),     # (r=0, s=1)
            ((1, 0), (1, 1), (2, 0), (2, 1)),     # (r=1, s=0)
            ((1, 1), (1, 2), (2, 1), (2, 2)))     # (r=1, s=1)
_UP_KIDX = (((3, 3), (3, 1), (1, 3), (1, 1)),
            ((3, 2), (3, 0), (1, 2), (1, 0)),
            ((2, 3), (2, 1), (0, 3), (0, 1)),
            ((2, 2), (2, 0), (0, 2), (0, 0)))


def conv_transpose2d_4x4_s2(x, up_sub_w, b):
    """x NHWC; up_sub_w: tuple of 4 (4, Cin, Cout) sub-pixel weight stacks."""
    B, H, W, _ = x.shape
    Cout = up_sub_w[0].shape[-1]
    xp = jnp.pad(x, ((0, 0), (1, 1), (1, 1), (0, 0)))
    subs = [tap_conv(xp, up_sub_w[g], b, _UP_TAPS[g], H, W) for g in range(4)]
    y = jnp.stack(subs, axis=3)                          # (B, H, W, 4, Cout)
    y = y.reshape(B, H, W, 2, 2, Cout).transpose(0, 1, 3, 2, 4, 5)
    return y.reshape(B, 2 * H, 2 * W, Cout)


# ----------------------------------------------------------------------------
# Bilinear resize (align_corners=False): per-image kernel, H axis via matmul,
# W axis via static 2-tap combine.  No zero-bias, no full-tensor relayouts.
# ----------------------------------------------------------------------------
def _interp_taps(out_size, in_size):
    lo, hi, wl, wh = [], [], [], []
    for o in range(out_size):
        src = max((o + 0.5) * in_size / out_size - 0.5, 0.0)
        l = min(int(np.floor(src)), in_size - 1)
        h = min(l + 1, in_size - 1)
        f = src - l
        lo.append(l); hi.append(h); wl.append(1.0 - f); wh.append(f)
    return tuple(lo), tuple(hi), tuple(wl), tuple(wh)


def _interp_matrix(out_size, in_size):
    A = np.zeros((out_size, in_size), np.float32)
    lo, hi, wl, wh = _interp_taps(out_size, in_size)
    for o in range(out_size):
        A[o, lo[o]] += wl[o]
        A[o, hi[o]] += wh[o]
    return jnp.asarray(A)


def _resize_kernel(x_ref, ah_ref, o_ref, *, H, W, OW, wtaps):
    x = x_ref[0]                                          # (H, W, C)
    C = x.shape[-1]
    t = jnp.dot(ah_ref[...], x.reshape(H, W * C),
                preferred_element_type=jnp.float32)       # (OH, W*C)
    OH = t.shape[0]
    t = t.reshape(OH, W, C)
    lo, hi, wl, wh = wtaps
    cols = [t[:, lo[o], :] * wl[o] + t[:, hi[o], :] * wh[o] for o in range(OW)]
    o_ref[0] = jnp.stack(cols, axis=1).astype(o_ref.dtype)


@functools.partial(jax.jit, static_argnames=("oh", "ow"))
def bilinear_resize(x, *, oh, ow):
    B, H, W, C = x.shape
    if oh == H and ow == W:
        return x
    ah = _interp_matrix(oh, H)
    wtaps = _interp_taps(ow, W)
    return pl.pallas_call(
        functools.partial(_resize_kernel, H=H, W=W, OW=ow, wtaps=wtaps),
        out_shape=jax.ShapeDtypeStruct((B, oh, ow, C), x.dtype),
        grid=(B,),
        in_specs=[pl.BlockSpec((1, H, W, C), lambda b: (b, 0, 0, 0)),
                  pl.BlockSpec((oh, H), lambda b: (0, 0))],
        out_specs=pl.BlockSpec((1, oh, ow, C), lambda b: (b, 0, 0, 0)),
        compiler_params=pltpu.CompilerParams(
            dimension_semantics=("parallel",), vmem_limit_bytes=_VMEM_LIMIT),
    )(x, ah)


# ----------------------------------------------------------------------------
# EncoderTransformer_x2 forward (NHWC tokens, both images batched together)
# ----------------------------------------------------------------------------
def block_forward(x, H, W, bp, num_heads, sr_ratio):
    B, N, C = x.shape
    d = C // num_heads
    scale = d ** -0.5
    ap, mp = bp['attn'], bp['mlp']
    x2 = x.reshape(B * N, C)                     # f32 residual stream

    # ---- attention branch ----
    if sr_ratio > 1:
        xn = pallas_layernorm(x2, bp['n1_g'], bp['n1_b'])
        q = fused_matmul(xn, ap['q_w'], out_dtype=jnp.bfloat16)
        xs = conv2d_im2col(xn.reshape(B, H, W, C), ap['sr_w'], ap['sr_b'],
                           stride=sr_ratio, padding=0)
        Hs, Ws = xs.shape[1], xs.shape[2]
        Mkv = Hs * Ws
        xs2 = pallas_layernorm(xs.reshape(B * Mkv, C),
                               ap['sr_ln_g'], ap['sr_ln_b'])
        kv = fused_matmul(xs2, ap['kv_w'], out_dtype=jnp.bfloat16)
        o = attention_sep(q.reshape(B, N, C), kv.reshape(B, Mkv, 2 * C),
                          num_heads=num_heads, scale=scale)
    else:
        # pre-norm fused into a single qkv matmul; attention reads it directly
        qkv = fused_matmul(x2, ap['qkv_w'], ln=(bp['n1_g'], bp['n1_b']),
                           out_dtype=jnp.bfloat16)
        o = attention_fused_qkv(qkv.reshape(B, N, 3 * C),
                                num_heads=num_heads, scale=scale)
    # x = x + attn(...)   (residual fused in the proj matmul epilogue)
    x2 = fused_matmul(o.reshape(B * N, C), ap['proj_w'], ap['proj_b'],
                      residual=x2)

    # ---- MLP branch (LN2 fused as prologue, GELU fused in dwconv) ----
    Hd = mp['fc1_w'].shape[1]
    h = fused_matmul(x2, mp['fc1_w'], mp['fc1_b'],
                     ln=(bp['n2_g'], bp['n2_b']), out_dtype=jnp.bfloat16)
    h = dwconv3x3_gelu(h.reshape(B, H, W, Hd), mp['dw_w'], mp['dw_b'])
    x2 = fused_matmul(h.reshape(B * N, Hd), mp['fc2_w'], mp['fc2_b'],
                      residual=x2)
    return x2.reshape(B, N, C)


def encoder_forward(x, params):
    """x: (B, H, W, 3) NHWC.  Returns 5 NHWC feature maps."""
    outs = []
    cur = x
    for s in range(5):
        ps = params['stages'][s]
        fmap = conv2d_im2col(cur, ps['pe_w'], ps['pe_b'], stride=2,
                             padding=PATCH_PADS[s])
        B, H, W, C = fmap.shape
        tok = pallas_layernorm(fmap.reshape(B * H * W, C),
                               ps['pe_ln_g'], ps['pe_ln_b'])
        tokens = tok.reshape(B, H * W, C)
        for bp in ps['blocks']:
            tokens = block_forward(tokens, H, W, bp, NUM_HEADS[s], SR_RATIOS[s])
        tok = pallas_layernorm(tokens.reshape(B * H * W, C),
                               ps['norm_g'], ps['norm_b'])
        cur = tok.reshape(B, H, W, C)
        outs.append(cur)
    return outs


# ----------------------------------------------------------------------------
# DecoderTransformer_x2 forward
# ----------------------------------------------------------------------------
def conv_diff_forward(x, dp, up):
    # Conv-ReLU-BN-Conv-ReLU (+ fused "+upsampled_prev" residual).
    scale = dp['bn_g'] / jnp.sqrt(dp['bn_v'] + 1e-5)
    shift = dp['bn_b'] - dp['bn_m'] * scale
    x = conv3x3(x, dp['w1'], dp['b1'], act="relu", affine=(scale, shift))
    return conv3x3(x, dp['w2'], dp['b2'], act="relu", residual=up)


def make_pred_forward(x, pp):
    # Cout padded to 128 lanes; extra channels are exact zeros -> slice back.
    h = conv3x3(x, pp['w1'], pp['b1'], act="relu")
    y = conv3x3(h, pp['w2'], pp['b2'])
    return y[..., :OUTPUT_NC]


def decoder_forward(f1, f2, prm):
    H1, W1 = f1[0].shape[1], f1[0].shape[2]
    ED = prm['lin1_w'].shape[1]
    outputs = []

    def embed_pair(idx, ca, cb):
        B, H, W, C = ca.shape
        both = jnp.concatenate([ca, cb], axis=0)               # (2B,H,W,C)
        e = fused_matmul(both.reshape(2 * B * H * W, C),
                         prm[f'lin{idx}_w'], prm[f'lin{idx}_b'])
        e = e.reshape(2 * B, H, W, ED)
        return jnp.concatenate([e[:B], e[B:]], axis=-1)        # (B,H,W,2*ED)

    def stage(idx, ca, cb, prev):
        cat = embed_pair(idx, ca, cb)
        up = None
        if prev is not None:
            up = bilinear_resize(prev, oh=prev.shape[1] * 2,
                                 ow=prev.shape[2] * 2)
        d = conv_diff_forward(cat, prm[f'diff{idx}'], up)
        outputs.append(make_pred_forward(d, prm[f'pred{idx}']))
        return d

    _c5 = stage(5, f1[4], f2[4], None)
    _c5_up = bilinear_resize(_c5, oh=H1, ow=W1)
    _c4 = stage(4, f1[3], f2[3], _c5)
    _c4_up = bilinear_resize(_c4, oh=H1, ow=W1)
    _c3 = stage(3, f1[2], f2[2], _c4)
    _c3_up = bilinear_resize(_c3, oh=H1, ow=W1)
    _c2 = stage(2, f1[1], f2[1], _c3)
    _c2_up = bilinear_resize(_c2, oh=H1, ow=W1)
    _c1 = stage(1, f1[0], f2[0], _c2)

    fused_in = jnp.concatenate([_c5_up, _c4_up, _c3_up, _c2_up, _c1], axis=-1)
    # linear_fuse = Conv1x1 + eval-BatchNorm (BN as a fused affine epilogue).
    scale = prm['fuse_bn_g'] / jnp.sqrt(prm['fuse_bn_v'] + 1e-5)
    shift = prm['fuse_bn_b'] - prm['fuse_bn_m'] * scale
    B = fused_in.shape[0]
    x = fused_matmul(fused_in.reshape(B * H1 * W1, 5 * ED), prm['fuse_w'],
                     prm['fuse_b'], affine=(scale, shift))
    x = x.reshape(B, H1, W1, ED)
    x = conv_transpose2d_4x4_s2(x, prm['up_sub_w'], prm['up_b'])
    # ResidualBlock: x + 0.1 * conv2(relu(conv1(x)))  (0.1 and add fused).
    y = conv3x3(x, prm['res']['w1'], prm['res']['b1'], act="relu")
    x = conv3x3(y, prm['res']['w2'], prm['res']['b2'],
                residual=x, res_scale=0.1)
    cp = conv3x3(x, prm['cp_w'], prm['cp_b'])[..., :OUTPUT_NC]
    outputs.append(cp)
    return outputs


def changeformer_v4_forward(inputs, params, training=False):
    x1 = jnp.transpose(inputs['img_1'], (0, 2, 3, 1))      # NCHW -> NHWC
    x2 = jnp.transpose(inputs['img_2'], (0, 2, 3, 1))
    B = x1.shape[0]
    # Single (batched) encoder pass over both images.
    feats = encoder_forward(jnp.concatenate([x1, x2], axis=0), params['enc'])
    f1 = [f[:B] for f in feats]
    f2 = [f[B:] for f in feats]
    cp = decoder_forward(f1, f2, params['dec'])
    cp = [jnp.transpose(c, (0, 3, 1, 2)) for c in cp]       # back to NCHW
    assert isinstance(cp, list)
    if not training:
        cp = cp[-1]
    return cp


# ----------------------------------------------------------------------------
# Deterministic parameter initialization (synthetic weights)
#   matmul / conv weights are stored bf16 in MXU-ready layouts:
#     * linear weights        (in, out)
#     * strided conv weights  (KH, KW, Cin, Cout)
#     * 3x3 decoder convs     (9, Cin, Cout) tap-major
#     * ConvTranspose2d       4 sub-pixel stacks of (4, Cin, Cout)
#   depthwise weights (9, C), biases / LN / BN params stay f32.
# ----------------------------------------------------------------------------
class _PG:
    def __init__(self, key):
        self.key = key

    def normal(self, shape, std=0.02):
        self.key, sub = jax.random.split(self.key)
        return std * jax.random.normal(sub, shape, jnp.float32)

    def bf16(self, shape, std=0.02):
        return self.normal(shape, std).astype(jnp.bfloat16)

    def zeros(self, shape):
        return jnp.zeros(shape, jnp.float32)

    def ones(self, shape):
        return jnp.ones(shape, jnp.float32)


def init_encoder(pg, input_nc):
    stages = []
    in_ch = input_nc
    for s in range(5):
        E, k = EMBED_DIMS[s], PATCH_SIZES[s]
        Hd = E * MLP_RATIOS[s]
        st = dict(pe_w=pg.bf16((k, k, in_ch, E)), pe_b=pg.zeros((E,)),
                  pe_ln_g=pg.ones((E,)), pe_ln_b=pg.zeros((E,)),
                  norm_g=pg.ones((E,)), norm_b=pg.zeros((E,)), blocks=[])
        for _ in range(DEPTHS[s]):
            if SR_RATIOS[s] > 1:
                attn = dict(q_w=pg.bf16((E, E)),
                            kv_w=pg.bf16((E, 2 * E)),
                            sr_w=pg.bf16((SR_RATIOS[s], SR_RATIOS[s], E, E)),
                            sr_b=pg.zeros((E,)),
                            sr_ln_g=pg.ones((E,)), sr_ln_b=pg.zeros((E,)),
                            proj_w=pg.bf16((E, E)), proj_b=pg.zeros((E,)))
            else:
                attn = dict(qkv_w=pg.bf16((E, 3 * E)),      # fused q|k|v
                            proj_w=pg.bf16((E, E)), proj_b=pg.zeros((E,)))
            mlp = dict(fc1_w=pg.bf16((E, Hd)), fc1_b=pg.zeros((Hd,)),
                       dw_w=pg.normal((9, Hd)), dw_b=pg.zeros((Hd,)),
                       fc2_w=pg.bf16((Hd, E)), fc2_b=pg.zeros((E,)))
            st['blocks'].append(dict(n1_g=pg.ones((E,)), n1_b=pg.zeros((E,)),
                                     n2_g=pg.ones((E,)), n2_b=pg.zeros((E,)),
                                     attn=attn, mlp=mlp))
        stages.append(st)
        in_ch = E
    return dict(stages=stages)


def init_decoder(pg, in_channels, ed, output_nc):
    p = {}
    for i, c in enumerate(in_channels, start=1):
        p[f'lin{i}_w'] = pg.bf16((c, ed))
        p[f'lin{i}_b'] = pg.zeros((ed,))
    pad = _PRED_PAD
    for i in range(1, 6):
        p[f'diff{i}'] = dict(w1=pg.bf16((9, 2 * ed, ed)), b1=pg.zeros((ed,)),
                             bn_g=pg.ones((ed,)), bn_b=pg.zeros((ed,)),
                             bn_m=pg.zeros((ed,)), bn_v=pg.ones((ed,)),
                             w2=pg.bf16((9, ed, ed)), b2=pg.zeros((ed,)))
        w1 = pg.normal((9, ed, output_nc))
        w2 = pg.normal((9, output_nc, output_nc))
        p[f'pred{i}'] = dict(
            w1=jnp.pad(w1, ((0, 0), (0, 0), (0, pad - output_nc))
                       ).astype(jnp.bfloat16),
            b1=pg.zeros((pad,)),
            w2=jnp.pad(w2, ((0, 0), (0, pad - output_nc), (0, pad - output_nc))
                       ).astype(jnp.bfloat16),
            b2=pg.zeros((pad,)))
    p['fuse_w'] = pg.bf16((5 * ed, ed))
    p['fuse_b'] = pg.zeros((ed,))
    p['fuse_bn_g'], p['fuse_bn_b'] = pg.ones((ed,)), pg.zeros((ed,))
    p['fuse_bn_m'], p['fuse_bn_v'] = pg.zeros((ed,)), pg.ones((ed,))
    up_t = pg.normal((ed, ed, 4, 4))            # torch ConvTranspose2d layout
    p['up_sub_w'] = tuple(
        jnp.stack([up_t[:, :, kh, kw] for (kh, kw) in _UP_KIDX[g]],
                  axis=0).astype(jnp.bfloat16) for g in range(4))
    p['up_b'] = pg.zeros((ed,))
    p['res'] = dict(w1=pg.bf16((9, ed, ed)), b1=pg.zeros((ed,)),
                    w2=pg.bf16((9, ed, ed)), b2=pg.zeros((ed,)))
    cp_w = pg.normal((9, ed, output_nc))
    p['cp_w'] = jnp.pad(cp_w, ((0, 0), (0, 0), (0, pad - output_nc))
                        ).astype(jnp.bfloat16)
    p['cp_b'] = pg.zeros((pad,))
    return p


# ----------------------------------------------------------------------------
if __name__ == "__main__":
    root = jax.random.PRNGKey(0)
    k_param, k_img1, k_img2 = jax.random.split(root, 3)

    pg = _PG(k_param)
    params = dict(enc=init_encoder(pg, INPUT_NC),
                  dec=init_decoder(pg, EMBED_DIMS, EMBEDDING_DIM, OUTPUT_NC))

    # Small, architecture-consistent input: batch=1, 3 channels, 32x32
    # (spatial must be divisible by 32 for the 5 stride-2 stages).
    img1 = jax.random.normal(k_img1, (1, INPUT_NC, 32, 32), jnp.float32)
    img2 = jax.random.normal(k_img2, (1, INPUT_NC, 32, 32), jnp.float32)

    out = changeformer_v4_forward({'img_1': img1, 'img_2': img2}, params,
                                  training=False)
    out = jax.block_until_ready(out)
    assert out.shape == (1, OUTPUT_NC, 32, 32), out.shape
    assert bool(jnp.all(jnp.isfinite(out)))
    print("KERNEL_OK")
</pallas_src>

<mosaic_0001>
module attributes {stable_mosaic.version = 11 : i64} {
  func.func @kernel(%arg0: i32, %arg1: i32, %arg2: memref<512x147xf32, #tpu.memory_space<vmem>>, %arg3: memref<147x32xbf16, #tpu.memory_space<vmem>>, %arg4: memref<1x32xf32, #tpu.memory_space<vmem>>, %arg5: memref<512x32xf32, #tpu.memory_space<vmem>>) attributes {dimension_semantics = [#tpu.dimension_semantics<parallel>, #tpu.dimension_semantics<parallel>], iteration_bounds = array<i64: 1, 1>, scalar_prefetch = 0 : i64, scratch_operands = 0 : i64, tpu.core_type = #tpu.core_type<tc>, window_params = [{transform_indices = @transform_0, window_bounds = array<i64: 512, 147>}, {transform_indices = @transform_1, window_bounds = array<i64: 147, 32>}, {transform_indices = @transform_2, window_bounds = array<i64: 1, 32>}, {transform_indices = @transform_3, window_bounds = array<i64: 512, 32>}]} {
    %c0 = arith.constant 0 : index
    %c0_0 = arith.constant 0 : index
    %0 = vector.load %arg2[%c0, %c0_0] : memref<512x147xf32, #tpu.memory_space<vmem>>, vector<512x147xf32>
    %1 = arith.truncf %0 : vector<512x147xf32> to vector<512x147xbf16>
    %c0_1 = arith.constant 0 : index
    %c0_2 = arith.constant 0 : index
    %2 = vector.load %arg3[%c0_1, %c0_2] : memref<147x32xbf16, #tpu.memory_space<vmem>>, vector<147x32xbf16>
    %cst = arith.constant dense<0.000000e+00> : vector<512x32xf32>
    %3 = tpu.matmul %1, %2, %cst {dimension_numbers = #tpu.dot_dimension_numbers<[1], [0], [0], [1], [0, 0, 1, 1], [], []>} : vector<512x147xbf16>, vector<147x32xbf16>, vector<512x32xf32> -> vector<512x32xf32>
    %c0_3 = arith.constant 0 : index
    %c0_4 = arith.constant 0 : index
    %4 = vector.load %arg4[%c0_3, %c0_4] : memref<1x32xf32, #tpu.memory_space<vmem>>, vector<1x32xf32>
    %5 = vector.broadcast %4 : vector<1x32xf32> to vector<512x32xf32>
    %6 = arith.addf %3, %5 : vector<512x32xf32>
    %c0_5 = arith.constant 0 : index
    %c0_6 = arith.constant 0 : index
    %7 = vector.load %arg5[%c0_5, %c0_6] : memref<512x32xf32, #tpu.memory_space<vmem>>, vector<512x32xf32>
    tpu.vector_store %arg5[%c0_5, %c0_6], %6 {strides = array<i32>} : memref<512x32xf32, #tpu.memory_space<vmem>>, vector<512x32xf32>,
    return
  }
  func.func @transform_0(%arg0: i32, %arg1: i32) -> (i32, i32) {
    %c0_i32 = arith.constant 0 : i32
    %c0_i32_0 = arith.constant 0 : i32
    return %arg0, %c0_i32 : i32, i32
  }
  func.func @transform_1(%arg0: i32, %arg1: i32) -> (i32, i32) {
    %c0_i32 = arith.constant 0 : i32
    %c0_i32_0 = arith.constant 0 : i32
    return %c0_i32, %arg1 : i32, i32
  }
  func.func @transform_2(%arg0: i32, %arg1: i32) -> (i32, i32) {
    %c0_i32 = arith.constant 0 : i32
    %c0_i32_0 = arith.constant 0 : i32
    return %c0_i32, %arg1 : i32, i32
  }
  func.func @transform_3(%arg0: i32, %arg1: i32) -> (i32, i32) {
    %c0_i32 = arith.constant 0 : i32
    return %arg0, %arg1 : i32, i32
  }
}

</mosaic_0001>

<llo_original>
// kernel: _fused_matmul.1
$region0: #{_fused_matmul.1}
  #allocation0 [shape = 'u32[]', space=smem, size = 0x4, offset = 0x4, fixed_abs, tag = 'smem constant byte address 0x4 - core index']
  #allocation1 [shape = 'u32[144,128]{1,0:T(1,128)}', space=vmem, size = 0x12000, scoped, tag = 'internal scratch']
  %s0 = inlined_call_operand.vmem [shape: f32[512,147], index: 0, kind: input, shape index: {}]
  %s1 = inlined_call_operand.vmem [shape: bf16[147,32], index: 1, kind: input, shape index: {}]
  %s2 = inlined_call_operand.vmem [shape: f32[1,32], index: 2, kind: input, shape index: {}]
  %s3 = inlined_call_operand.vmem [shape: f32[512,32], index: 3, kind: output, shape index: {}]
  %s4 = sld [smem:[#allocation0]]
  $region22: #{_fused_matmul.1} parent=0
    _
  %s6 = ssub.s32 1, %s4
  %s7 = scalar_select 0, %s6, %s4
  // Predicated region
  $region2: #{_fused_matmul.1} parent=0 // pred_check
    _
  $region3: #{_fused_matmul.1} parent=0 // pred_check_branch
    %9 = sbr.rel (0) target = $region5
  $region4: #{_fused_matmul.1} parent=0 // pred_region
    _
  $region5: #{_fused_matmul.1} parent=0 // pred_fallthru
    _
  // Predicated region
  $region6: #{_fused_matmul.1} parent=0 // pred_check
    _
  $region7: #{_fused_matmul.1} parent=0 // pred_check_branch
    %11 = sbr.rel (0) target = $region9
  $region8: #{_fused_matmul.1} parent=0 // pred_region
    _
  $region9: #{_fused_matmul.1} parent=0 // pred_fallthru
    _
  // Predicated region
  $region10: #{_fused_matmul.1} parent=0 // pred_check
    _
  $region11: #{_fused_matmul.1} parent=0 // pred_check_branch
    %13 = sbr.rel (0) target = $region13
  $region12: #{_fused_matmul.1} parent=0 // pred_region
    _
  $region13: #{_fused_matmul.1} parent=0 // pred_fallthru
    _
  %v15 = vld [vmem:[%s0] sm:$0xff]
  %v16 = vld [vmem:[%s0 + $0x8] sm:$0xff]
  %v17 = vld [vmem:[%s0 + $0x10] sm:$0xff]
  %v18 = vld [vmem:[%s0 + $0x18] sm:$0xff]
  %v19 = vld [vmem:[%s0 + $0x20] sm:$0xff]
  %v20 = vld [vmem:[%s0 + $0x28] sm:$0xff]
  %v21 = vld [vmem:[%s0 + $0x30] sm:$0xff]
  %v22 = vld [vmem:[%s0 + $0x38] sm:$0xff]
  %v23 = vld [vmem:[%s0 + $0x40] sm:$0xff]
  %v24 = vld [vmem:[%s0 + $0x48] sm:$0xff]
  %v25 = vld [vmem:[%s0 + $0x50] sm:$0xff]
  %v26 = vld [vmem:[%s0 + $0x58] sm:$0xff]
  %v27 = vld [vmem:[%s0 + $0x60] sm:$0xff]
  %v28 = vld [vmem:[%s0 + $0x68] sm:$0xff]
  %v29 = vld [vmem:[%s0 + $0x70] sm:$0xff]
  %v30 = vld [vmem:[%s0 + $0x78] sm:$0xff]
  %v31 = vld [vmem:[%s0 + $0x80] sm:$0xff]
  %v32 = vld [vmem:[%s0 + $0x88] sm:$0xff]
  %v33 = vld [vmem:[%s0 + $0x90] sm:$0xff]
  %v34 = vld [vmem:[%s0 + $0x98] sm:$0xff]
  %v35 = vld [vmem:[%s0 + $0xa0] sm:$0xff]
  %v36 = vld [vmem:[%s0 + $0xa8] sm:$0xff]
  %v37 = vld [vmem:[%s0 + $0xb0] sm:$0xff]
  %v38 = vld [vmem:[%s0 + $0xb8] sm:$0xff]
  %v39 = vld [vmem:[%s0 + $0xc0] sm:$0xff]
  %v40 = vld [vmem:[%s0 + $0xc8] sm:$0xff]
  %v41 = vld [vmem:[%s0 + $0xd0] sm:$0xff]
  %v42 = vld [vmem:[%s0 + $0xd8] sm:$0xff]
  %v43 = vld [vmem:[%s0 + $0xe0] sm:$0xff]
  %v44 = vld [vmem:[%s0 + $0xe8] sm:$0xff]
  %v45 = vld [vmem:[%s0 + $0xf0] sm:$0xff]
  %v46 = vld [vmem:[%s0 + $0xf8] sm:$0xff]
  %v47 = vld [vmem:[%s0 + $0x100] sm:$0xff]
  %v48 = vld [vmem:[%s0 + $0x108] sm:$0xff]
  %v49 = vld [vmem:[%s0 + $0x110] sm:$0xff]
  %v50 = vld [vmem:[%s0 + $0x118] sm:$0xff]
  %v51 = vld [vmem:[%s0 + $0x120] sm:$0xff]
  %v52 = vld [vmem:[%s0 + $0x128] sm:$0xff]
  %v53 = vld [vmem:[%s0 + $0x130] sm:$0xff]
  %v54 = vld [vmem:[%s0 + $0x138] sm:$0xff]
  %v55 = vld [vmem:[%s0 + $0x140] sm:$0xff]
  %v56 = vld [vmem:[%s0 + $0x148] sm:$0xff]
  %v57 = vld [vmem:[%s0 + $0x150] sm:$0xff]
  %v58 = vld [vmem:[%s0 + $0x158] sm:$0xff]
  %v59 = vld [vmem:[%s0 + $0x160] sm:$0xff]
  %v60 = vld [vmem:[%s0 + $0x168] sm:$0xff]
  %v61 = vld [vmem:[%s0 + $0x170] sm:$0xff]
  %v62 = vld [vmem:[%s0 + $0x178] sm:$0xff]
  %v63 = vld [vmem:[%s0 + $0x180] sm:$0xff]
  %v64 = vld [vmem:[%s0 + $0x188] sm:$0xff]
  %v65 = vld [vmem:[%s0 + $0x190] sm:$0xff]
  %v66 = vld [vmem:[%s0 + $0x198] sm:$0xff]
  %v67 = vld [vmem:[%s0 + $0x1a0] sm:$0xff]
  %v68 = vld [vmem:[%s0 + $0x1a8] sm:$0xff]
  %v69 = vld [vmem:[%s0 + $0x1b0] sm:$0xff]
  %v70 = vld [vmem:[%s0 + $0x1b8] sm:$0xff]
  %v71 = vld [vmem:[%s0 + $0x1c0] sm:$0xff]
  %v72 = vld [vmem:[%s0 + $0x1c8] sm:$0xff]
  %v73 = vld [vmem:[%s0 + $0x1d0] sm:$0xff]
  %v74 = vld [vmem:[%s0 + $0x1d8] sm:$0xff]
  %v75 = vld [vmem:[%s0 + $0x1e0] sm:$0xff]
  %v76 = vld [vmem:[%s0 + $0x1e8] sm:$0xff]
  %v77 = vld [vmem:[%s0 + $0x1f0] sm:$0xff]
  %v78 = vld [vmem:[%s0 + $0x1f8] sm:$0xff]
  %v79 = vld [vmem:[%s0 + $0x200] sm:$0xff]
  %v80 = vld [vmem:[%s0 + $0x208] sm:$0xff]
  %v81 = vld [vmem:[%s0 + $0x210] sm:$0xff]
  %v82 = vld [vmem:[%s0 + $0x218] sm:$0xff]
  %v83 = vld [vmem:[%s0 + $0x220] sm:$0xff]
  %v84 = vld [vmem:[%s0 + $0x228] sm:$0xff]
  %v85 = vld [vmem:[%s0 + $0x230] sm:$0xff]
  %v86 = vld [vmem:[%s0 + $0x238] sm:$0xff]
  %v87 = vld [vmem:[%s0 + $0x240] sm:$0xff]
  %v88 = vld [vmem:[%s0 + $0x248] sm:$0xff]
  %v89 = vld [vmem:[%s0 + $0x250] sm:$0xff]
  %v90 = vld [vmem:[%s0 + $0x258] sm:$0xff]
  %v91 = vld [vmem:[%s0 + $0x260] sm:$0xff]
  %v92 = vld [vmem:[%s0 + $0x268] sm:$0xff]
  %v93 = vld [vmem:[%s0 + $0x270] sm:$0xff]
  %v94 = vld [vmem:[%s0 + $0x278] sm:$0xff]
  %v95 = vld [vmem:[%s0 + $0x280] sm:$0xff]
  %v96 = vld [vmem:[%s0 + $0x288] sm:$0xff]
  %v97 = vld [vmem:[%s0 + $0x290] sm:$0xff]
  %v98 = vld [vmem:[%s0 + $0x298] sm:$0xff]
  %v99 = vld [vmem:[%s0 + $0x2a0] sm:$0xff]
  %v100 = vld [vmem:[%s0 + $0x2a8] sm:$0xff]
  %v101 = vld [vmem:[%s0 + $0x2b0] sm:$0xff]
  %v102 = vld [vmem:[%s0 + $0x2b8] sm:$0xff]
  %v103 = vld [vmem:[%s0 + $0x2c0] sm:$0xff]
  %v104 = vld [vmem:[%s0 + $0x2c8] sm:$0xff]
  %v105 = vld [vmem:[%s0 + $0x2d0] sm:$0xff]
  %v106 = vld [vmem:[%s0 + $0x2d8] sm:$0xff]
  %v107 = vld [vmem:[%s0 + $0x2e0] sm:$0xff]
  %v108 = vld [vmem:[%s0 + $0x2e8] sm:$0xff]
  %v109 = vld [vmem:[%s0 + $0x2f0] sm:$0xff]
  %v110 = vld [vmem:[%s0 + $0x2f8] sm:$0xff]
  %v111 = vld [vmem:[%s0 + $0x300] sm:$0xff]
  %v112 = vld [vmem:[%s0 + $0x308] sm:$0xff]
  %v113 = vld [vmem:[%s0 + $0x310] sm:$0xff]
  %v114 = vld [vmem:[%s0 + $0x318] sm:$0xff]
  %v115 = vld [vmem:[%s0 + $0x320] sm:$0xff]
  %v116 = vld [vmem:[%s0 + $0x328] sm:$0xff]
  %v117 = vld [vmem:[%s0 + $0x330] sm:$0xff]
  %v118 = vld [vmem:[%s0 + $0x338] sm:$0xff]
  %v119 = vld [vmem:[%s0 + $0x340] sm:$0xff]
  %v120 = vld [vmem:[%s0 + $0x348] sm:$0xff]
  %v121 = vld [vmem:[%s0 + $0x350] sm:$0xff]
  %v122 = vld [vmem:[%s0 + $0x358] sm:$0xff]
  %v123 = vld [vmem:[%s0 + $0x360] sm:$0xff]
  %v124 = vld [vmem:[%s0 + $0x368] sm:$0xff]
  %v125 = vld [vmem:[%s0 + $0x370] sm:$0xff]
  %v126 = vld [vmem:[%s0 + $0x378] sm:$0xff]
  %v127 = vld [vmem:[%s0 + $0x380] sm:$0xff]
  %v128 = vld [vmem:[%s0 + $0x388] sm:$0xff]
  %v129 = vld [vmem:[%s0 + $0x390] sm:$0xff]
  %v130 = vld [vmem:[%s0 + $0x398] sm:$0xff]
  %v131 = vld [vmem:[%s0 + $0x3a0] sm:$0xff]
  %v132 = vld [vmem:[%s0 + $0x3a8] sm:$0xff]
  %v133 = vld [vmem:[%s0 + $0x3b0] sm:$0xff]
  %v134 = vld [vmem:[%s0 + $0x3b8] sm:$0xff]
  %v135 = vld [vmem:[%s0 + $0x3c0] sm:$0xff]
  %v136 = vld [vmem:[%s0 + $0x3c8] sm:$0xff]
  %v137 = vld [vmem:[%s0 + $0x3d0] sm:$0xff]
  %v138 = vld [vmem:[%s0 + $0x3d8] sm:$0xff]
  %v139 = vld [vmem:[%s0 + $0x3e0] sm:$0xff]
  %v140 = vld [vmem:[%s0 + $0x3e8] sm:$0xff]
  %v141 = vld [vmem:[%s0 + $0x3f0] sm:$0xff]
  %v142 = vld [vmem:[%s0 + $0x3f8] sm:$0xff]
  %v143 = vpack.c.bf16 %v17, %v15
  %v144 = vpack.c.bf16 %v18, %v16
  %v145 = vpack.c.bf16 %v21, %v19
  %v146 = vpack.c.bf16 %v22, %v20
  %v147 = vpack.c.bf16 %v25, %v23
  %v148 = vpack.c.bf16 %v26, %v24
  %v149 = vpack.c.bf16 %v29, %v27
  %v150 = vpack.c.bf16 %v30, %v28
  %v151 = vpack.c.bf16 %v33, %v31
  %v152 = vpack.c.bf16 %v34, %v32
  %v153 = vpack.c.bf16 %v37, %v35
  %v154 = vpack.c.bf16 %v38, %v36
  %v155 = vpack.c.bf16 %v41, %v39
  %v156 = vpack.c.bf16 %v42, %v40
  %v157 = vpack.c.bf16 %v45, %v43
  %v158 = vpack.c.bf16 %v46, %v44
  %v159 = vpack.c.bf16 %v49, %v47
  %v160 = vpack.c.bf16 %v50, %v48
  %v161 = vpack.c.bf16 %v53, %v51
  %v162 = vpack.c.bf16 %v54, %v52
  %v163 = vpack.c.bf16 %v57, %v55
  %v164 = vpack.c.bf16 %v58, %v56
  %v165 = vpack.c.bf16 %v61, %v59
  %v166 = vpack.c.bf16 %v62, %v60
  %v167 = vpack.c.bf16 %v65, %v63
  %v168 = vpack.c.bf16 %v66, %v64
  %v169 = vpack.c.bf16 %v69, %v67
  %v170 = vpack.c.bf16 %v70, %v68
  %v171 = vpack.c.bf16 %v73, %v71
  %v172 = vpack.c.bf16 %v74, %v72
  %v173 = vpack.c.bf16 %v77, %v75
  %v174 = vpack.c.bf16 %v78, %v76
  %v175 = vpack.c.bf16 %v81, %v79
  %v176 = vpack.c.bf16 %v82, %v80
  %v177 = vpack.c.bf16 %v85, %v83
  %v178 = vpack.c.bf16 %v86, %v84
  %v179 = vpack.c.bf16 %v89, %v87
  %v180 = vpack.c.bf16 %v90, %v88
  %v181 = vpack.c.bf16 %v93, %v91
  %v182 = vpack.c.bf16 %v94, %v92
  %v183 = vpack.c.bf16 %v97, %v95
  %v184 = vpack.c.bf16 %v98, %v96
  %v185 = vpack.c.bf16 %v101, %v99
  %v186 = vpack.c.bf16 %v102, %v100
  %v187 = vpack.c.bf16 %v105, %v103
  %v188 = vpack.c.bf16 %v106, %v104
  %v189 = vpack.c.bf16 %v109, %v107
  %v190 = vpack.c.bf16 %v110, %v108
  %v191 = vpack.c.bf16 %v113, %v111
  %v192 = vpack.c.bf16 %v114, %v112
  %v193 = vpack.c.bf16 %v117, %v115
  %v194 = vpack.c.bf16 %v118, %v116
  %v195 = vpack.c.bf16 %v121, %v119
  %v196 = vpack.c.bf16 %v122, %v120
  %v197 = vpack.c.bf16 %v125, %v123
  %v198 = vpack.c.bf16 %v126, %v124
  %v199 = vpack.c.bf16 %v129, %v127
  %v200 = vpack.c.bf16 %v130, %v128
  %v201 = vpack.c.bf16 %v133, %v131
  %v202 = vpack.c.bf16 %v134, %v132
  %v203 = vpack.c.bf16 %v137, %v135
  %v204 = vpack.c.bf16 %v138, %v136
  %v205 = vpack.c.bf16 %v141, %v139
  %v206 = vpack.c.bf16 %v142, %v140
  %v207 = vld [vmem:[%s1] sm:$0xf]
  %v208 = vld [vmem:[%s1 + $0x4] sm:$0xf]
  %v209 = vld [vmem:[%s1 + $0x8] sm:$0xf]
  %v210 = vld [vmem:[%s1 + $0xc] sm:$0xf]
  %v211 = vld [vmem:[%s1 + $0x10] sm:$0xf]
  %v212 = vld [vmem:[%s1 + $0x14] sm:$0xf]
  %v213 = vld [vmem:[%s1 + $0x18] sm:$0xf]
  %v214 = vld [vmem:[%s1 + $0x1c] sm:$0xf]
  %v215 = vld [vmem:[%s1 + $0x20] sm:$0xf]
  %v216 = vld [vmem:[%s1 + $0x24] sm:$0xf]
  %v217 = vld [vmem:[%s1 + $0x28] sm:$0xf]
  %v218 = vld [vmem:[%s1 + $0x2c] sm:$0xf]
  %v219 = vld [vmem:[%s1 + $0x30] sm:$0xf]
  %v220 = vld [vmem:[%s1 + $0x34] sm:$0xf]
  %v221 = vld [vmem:[%s1 + $0x38] sm:$0xf]
  %v222 = vld [vmem:[%s1 + $0x3c] sm:$0xf]
  %v223 = vld [vmem:[%s1 + $0x40] sm:$0xf]
  %v224 = vld [vmem:[%s1 + $0x44] sm:$0xf]
  %v225 = vld [vmem:[%s1 + $0x48] sm:$0x3]
  %v226 = vld [vmem:[%s2] sm:$0x1]
  %v228 = vlaneseq
  %v229 = vshrl.u32 %v228, 7
  %v230 = vsub.s32 0, %v229
  %v231 = vrot.slane %v226, %v230
  %v252 = vunpack.c.l.b16 %v207
  %v253 = vunpack.c.l.b16 %v208
  %v254 = vunpack.c.l.b16 %v209
  %v255 = vunpack.c.l.b16 %v210
  %v256 = vunpack.c.l.b16 %v211
  %v257 = vunpack.c.l.b16 %v212
  %v258 = vunpack.c.l.b16 %v213
  %v259 = vunpack.c.l.b16 %v214
  %v260 = vunpack.c.l.b16 %v215
  %v261 = vunpack.c.l.b16 %v216
  %v262 = vunpack.c.l.b16 %v217
  %v263 = vunpack.c.l.b16 %v218
  %v264 = vunpack.c.l.b16 %v219
  %v265 = vunpack.c.l.b16 %v220
  %v266 = vunpack.c.l.b16 %v221
  %v267 = vunpack.c.l.b16 %v222
  %v268 = vunpack.c.l.b16 %v223
  %v269 = vunpack.c.l.b16 %v224
  %v270 = vunpack.c.l.b16 %v225
  %v271 = vpack.c.b16 %v253, %v252
  %v272 = vpack.c.b16 %v255, %v254
  %v273 = vpack.c.b16 %v257, %v256
  %v274 = vpack.c.b16 %v259, %v258
  %v275 = vpack.c.b16 %v261, %v260
  %v276 = vpack.c.b16 %v263, %v262
  %v277 = vpack.c.b16 %v265, %v264
  %v278 = vpack.c.b16 %v267, %v266
  %v279 = vpack.c.b16 %v269, %v268
  %v280 = vpack.c.b16 %v270, %v270
  %vm290 = vcmask 154624
  %v292 = vsel %vm290, %v144, 0
  %v295 = vsel %vm290, %v146, 0
  %v298 = vsel %vm290, %v148, 0
  %v301 = vsel %vm290, %v150, 0
  %v304 = vsel %vm290, %v152, 0
  %v307 = vsel %vm290, %v154, 0
  %v310 = vsel %vm290, %v156, 0
  %v313 = vsel %vm290, %v158, 0
  %v316 = vsel %vm290, %v160, 0
  %v319 = vsel %vm290, %v162, 0
  %v322 = vsel %vm290, %v164, 0
  %v325 = vsel %vm290, %v166, 0
  %v328 = vsel %vm290, %v168, 0
  %v331 = vsel %vm290, %v170, 0
  %v334 = vsel %vm290, %v172, 0
  %v337 = vsel %vm290, %v174, 0
  %v340 = vsel %vm290, %v176, 0
  %v343 = vsel %vm290, %v178, 0
  %v346 = vsel %vm290, %v180, 0
  %v349 = vsel %vm290, %v182, 0
  %v352 = vsel %vm290, %v184, 0
  %v355 = vsel %vm290, %v186, 0
  %v358 = vsel %vm290, %v188, 0
  %v361 = vsel %vm290, %v190, 0
  %v364 = vsel %vm290, %v192, 0
  %v367 = vsel %vm290, %v194, 0
  %v370 = vsel %vm290, %v196, 0
  %v373 = vsel %vm290, %v198, 0
  %v376 = vsel %vm290, %v200, 0
  %v379 = vsel %vm290, %v202, 0
  %v382 = vsel %vm290, %v204, 0
  %v385 = vsel %vm290, %v206, 0
  %vm387 = vcmask 1040384
  %vm388 = vcmask 1041408
  %v389 = vsel %vm387, 4294967295, 65535
  %v390 = vsel %vm388, %v389, 0
  %v392 = vand.u32 %v280, %v390
  %394 = vmatprep.subr.bf16.mxu0 0
  %395 = vmatpush1.bf16.msra.mxu0 %v271
  %396 = vmatprep.subr.bf16.mxu0 0
  %397 = vmatpush1.bf16.msra.mxu0 %v272
  %398 = vmatprep.subr.bf16.mxu0 0
  %399 = vmatpush1.bf16.msra.mxu0 %v273
  %400 = vmatprep.subr.bf16.mxu0 0
  %401 = vmatpush1.bf16.msra.mxu0 %v274
  %402 = vmatprep.subr.bf16.mxu0 0
  %403 = vmatpush1.bf16.msra.mxu0 %v275
  %404 = vmatprep.subr.bf16.mxu0 0
  %405 = vmatpush1.bf16.msra.mxu0 %v276
  %406 = vmatprep.subr.bf16.mxu0 0
  %407 = vmatpush1.bf16.msra.mxu0 %v277
  %408 = vmatprep.subr.bf16.mxu0 0
  %409 = vmatpush1.bf16.msra.mxu0 %v278
  %410 = vmatprep.subr.bf16.mxu0 0
  %411 = vmatpush1.bf16.msra.mxu0 %v279
  %412 = vmatprep.subr.bf16.mxu0 0
  %413 = vmatpush1.bf16.msra.mxu0 %v392
  %414 = vmatprep.subr.bf16.mxu0 0
  %415 = vmatpush1.bf16.msra.mxu0 0
  %416 = vmatprep.subr.bf16.mxu0 0
  %417 = vmatpush1.bf16.msra.mxu0 0
  %418 = vmatprep.subr.bf16.mxu0 0
  %419 = vmatpush1.bf16.msra.mxu0 0
  %420 = vmatprep.subr.bf16.mxu0 0
  %421 = vmatpush1.bf16.msra.mxu0 0
  %422 = vmatprep.subr.bf16.mxu0 0
  %423 = vmatpush1.bf16.msra.mxu0 0
  %424 = vmatprep.subr.bf16.mxu0 0
  %425 = vmatpush1.bf16.msra.mxu0 0
  %426 = vmatprep.mubr.bf16.mxu0 %v292
  %427 = vmatmul.mubr.bf16.gmra.mrb[0].mxu0 %v143
  %v428 = vpop.f32.mrb[0].mxu0
  %v429 = vadd.f32 %v231, %v428
  %v430 = vpop.f32.mrb[0].mxu0
  %v431 = vpop.f32.mrb[0].mxu0
  %v432 = vadd.f32 %v231, %v431
  %v433 = vpop.f32.mrb[0].mxu0
  %434 = vmatprep.mubr.bf16.mxu0 %v295
  %435 = vmatmul.mubr.bf16.gmra.mrb[0].mxu0 %v145
  %v436 = vpop.f32.mrb[0].mxu0
  %v437 = vadd.f32 %v231, %v436
  %v438 = vpop.f32.mrb[0].mxu0
  %v439 = vpop.f32.mrb[0].mxu0
  %v440 = vadd.f32 %v231, %v439
  %v441 = vpop.f32.mrb[0].mxu0
  %442 = vmatprep.mubr.bf16.mxu0 %v298
  %443 = vmatmul.mubr.bf16.gmra.mrb[0].mxu0 %v147
  %v444 = vpop.f32.mrb[0].mxu0
  %v445 = vadd.f32 %v231, %v444
  %v446 = vpop.f32.mrb[0].mxu0
  %v447 = vpop.f32.mrb[0].mxu0
  %v448 = vadd.f32 %v231, %v447
  %v449 = vpop.f32.mrb[0].mxu0
  %450 = vmatprep.mubr.bf16.mxu0 %v301
  %451 = vmatmul.mubr.bf16.gmra.mrb[0].mxu0 %v149
  %v452 = vpop.f32.mrb[0].mxu0
  %v453 = vadd.f32 %v231, %v452
  %v454 = vpop.f32.mrb[0].mxu0
  %v455 = vpop.f32.mrb[0].mxu0
  %v456 = vadd.f32 %v231, %v455
  %v457 = vpop.f32.mrb[0].mxu0
  %458 = vmatprep.mubr.bf16.mxu0 %v304
  %459 = vmatmul.mubr.bf16.gmra.mrb[0].mxu0 %v151
  %v460 = vpop.f32.mrb[0].mxu0
  %v461 = vadd.f32 %v231, %v460
  %v462 = vpop.f32.mrb[0].mxu0
  %v463 = vpop.f32.mrb[0].mxu0
  %v464 = vadd.f32 %v231, %v463
  %v465 = vpop.f32.mrb[0].mxu0
  %466 = vmatprep.mubr.bf16.mxu0 %v307
  %467 = vmatmul.mubr.bf16.gmra.mrb[0].mxu0 %v153
  %v468 = vpop.f32.mrb[0].mxu0
  %v469 = vadd.f32 %v231, %v468
  %v470 = vpop.f32.mrb[0].mxu0
  %v471 = vpop.f32.mrb[0].mxu0
  %v472 = vadd.f32 %v231, %v471
  %v473 = vpop.f32.mrb[0].mxu0
  %474 = vmatprep.mubr.bf16.mxu0 %v310
  %475 = vmatmul.mubr.bf16.gmra.mrb[0].mxu0 %v155
  %v476 = vpop.f32.mrb[0].mxu0
  %v477 = vadd.f32 %v231, %v476
  %v478 = vpop.f32.mrb[0].mxu0
  %v479 = vpop.f32.mrb[0].mxu0
  %v480 = vadd.f32 %v231, %v479
  %v481 = vpop.f32.mrb[0].mxu0
  %482 = vmatprep.mubr.bf16.mxu0 %v313
  %483 = vmatmul.mubr.bf16.gmra.mrb[0].mxu0 %v157
  %v484 = vpop.f32.mrb[0].mxu0
  %v485 = vadd.f32 %v231, %v484
  %v486 = vpop.f32.mrb[0].mxu0
  %v487 = vpop.f32.mrb[0].mxu0
  %v488 = vadd.f32 %v231, %v487
  %v489 = vpop.f32.mrb[0].mxu0
  %490 = vmatprep.mubr.bf16.mxu0 %v316
  %491 = vmatmul.mubr.bf16.gmra.mrb[0].mxu0 %v159
  %v492 = vpop.f32.mrb[0].mxu0
  %v493 = vadd.f32 %v231, %v492
  %v494 = vpop.f32.mrb[0].mxu0
  %v495 = vpop.f32.mrb[0].mxu0
  %v496 = vadd.f32 %v231, %v495
  %v497 = vpop.f32.mrb[0].mxu0
  %498 = vmatprep.mubr.bf16.mxu0 %v319
  %499 = vmatmul.mubr.bf16.gmra.mrb[0].mxu0 %v161
  %v500 = vpop.f32.mrb[0].mxu0
  %v501 = vadd.f32 %v231, %v500
  %v502 = vpop.f32.mrb[0].mxu0
  %v503 = vpop.f32.mrb[0].mxu0
  %v504 = vadd.f32 %v231, %v503
  %v505 = vpop.f32.mrb[0].mxu0
  %506 = vmatprep.mubr.bf16.mxu0 %v322
  %507 = vmatmul.mubr.bf16.gmra.mrb[0].mxu0 %v163
  %v508 = vpop.f32.mrb[0].mxu0
  %v509 = vadd.f32 %v231, %v508
  %v510 = vpop.f32.mrb[0].mxu0
  %v511 = vpop.f32.mrb[0].mxu0
  %v512 = vadd.f32 %v231, %v511
  %v513 = vpop.f32.mrb[0].mxu0
  %514 = vmatprep.mubr.bf16.mxu0 %v325
  %515 = vmatmul.mubr.bf16.gmra.mrb[0].mxu0 %v165
  %v516 = vpop.f32.mrb[0].mxu0
  %v517 = vadd.f32 %v231, %v516
  %v518 = vpop.f32.mrb[0].mxu0
  %v519 = vpop.f32.mrb[0].mxu0
  %v520 = vadd.f32 %v231, %v519
  %v521 = vpop.f32.mrb[0].mxu0
  %522 = vmatprep.mubr.bf16.mxu0 %v328
  %523 = vmatmul.mubr.bf16.gmra.mrb[0].mxu0 %v167
  %v524 = vpop.f32.mrb[0].mxu0
  %v525 = vadd.f32 %v231, %v524
  %v526 = vpop.f32.mrb[0].mxu0
  %v527 = vpop.f32.mrb[0].mxu0
  %v528 = vadd.f32 %v231, %v527
  %v529 = vpop.f32.mrb[0].mxu0
  %530 = vmatprep.mubr.bf16.mxu0 %v331
  %531 = vmatmul.mubr.bf16.gmra.mrb[0].mxu0 %v169
  %v532 = vpop.f32.mrb[0].mxu0
  %v533 = vadd.f32 %v231, %v532
  %v534 = vpop.f32.mrb[0].mxu0
  %v535 = vpop.f32.mrb[0].mxu0
  %v536 = vadd.f32 %v231, %v535
  %v537 = vpop.f32.mrb[0].mxu0
  %538 = vmatprep.mubr.bf16.mxu0 %v334
  %539 = vmatmul.mubr.bf16.gmra.mrb[0].mxu0 %v171
  %v540 = vpop.f32.mrb[0].mxu0
  %v541 = vadd.f32 %v231, %v540
  %v542 = vpop.f32.mrb[0].mxu0
  %v543 = vpop.f32.mrb[0].mxu0
  %v544 = vadd.f32 %v231, %v543
  %v545 = vpop.f32.mrb[0].mxu0
  %546 = vmatprep.mubr.bf16.mxu0 %v337
  %547 = vmatmul.mubr.bf16.gmra.mrb[0].mxu0 %v173
  %v548 = vpop.f32.mrb[0].mxu0
  %v549 = vadd.f32 %v231, %v548
  %v550 = vpop.f32.mrb[0].mxu0
  %v551 = vpop.f32.mrb[0].mxu0
  %v552 = vadd.f32 %v231, %v551
  %v553 = vpop.f32.mrb[0].mxu0
  %554 = vmatprep.mubr.bf16.mxu0 %v340
  %555 = vmatmul.mubr.bf16.gmra.mrb[0].mxu0 %v175
  %v556 = vpop.f32.mrb[0].mxu0
  %v557 = vadd.f32 %v231, %v556
  %v558 = vpop.f32.mrb[0].mxu0
  %v559 = vpop.f32.mrb[0].mxu0
  %v560 = vadd.f32 %v231, %v559
  %v561 = vpop.f32.mrb[0].mxu0
  %562 = vmatprep.mubr.bf16.mxu0 %v343
  %563 = vmatmul.mubr.bf16.gmra.mrb[0].mxu0 %v177
  %v564 = vpop.f32.mrb[0].mxu0
  %v565 = vadd.f32 %v231, %v564
  %v566 = vpop.f32.mrb[0].mxu0
  %v567 = vpop.f32.mrb[0].mxu0
  %v568 = vadd.f32 %v231, %v567
  %v569 = vpop.f32.mrb[0].mxu0
  %570 = vmatprep.mubr.bf16.mxu0 %v346
  %571 = vmatmul.mubr.bf16.gmra.mrb[0].mxu0 %v179
  %v572 = vpop.f32.mrb[0].mxu0
  %v573 = vadd.f32 %v231, %v572
  %v574 = vpop.f32.mrb[0].mxu0
  %v575 = vpop.f32.mrb[0].mxu0
  %v576 = vadd.f32 %v231, %v575
  %v577 = vpop.f32.mrb[0].mxu0
  %578 = vmatprep.mubr.bf16.mxu0 %v349
  %579 = vmatmul.mubr.bf16.gmra.mrb[0].mxu0 %v181
  %v580 = vpop.f32.mrb[0].mxu0
  %v581 = vadd.f32 %v231, %v580
  %v582 = vpop.f32.mrb[0].mxu0
  %v583 = vpop.f32.mrb[0].mxu0
  %v584 = vadd.f32 %v231, %v583
  %v585 = vpop.f32.mrb[0].mxu0
  %586 = vmatprep.mubr.bf16.mxu0 %v352
  %587 = vmatmul.mubr.bf16.gmra.mrb[0].mxu0 %v183
  %v588 = vpop.f32.mrb[0].mxu0
  %v589 = vadd.f32 %v231, %v588
  %v590 = vpop.f32.mrb[0].mxu0
  %v591 = vpop.f32.mrb[0].mxu0
  %v592 = vadd.f32 %v231, %v591
  %v593 = vpop.f32.mrb[0].mxu0
  %594 = vmatprep.mubr.bf16.mxu0 %v355
  %595 = vmatmul.mubr.bf16.gmra.mrb[0].mxu0 %v185
  %v596 = vpop.f32.mrb[0].mxu0
  %v597 = vadd.f32 %v231, %v596
  %v598 = vpop.f32.mrb[0].mxu0
  %v599 = vpop.f32.mrb[0].mxu0
  %v600 = vadd.f32 %v231, %v599
  %v601 = vpop.f32.mrb[0].mxu0
  %602 = vmatprep.mubr.bf16.mxu0 %v358
  %603 = vmatmul.mubr.bf16.gmra.mrb[0].mxu0 %v187
  %v604 = vpop.f32.mrb[0].mxu0
  %v605 = vadd.f32 %v231, %v604
  %v606 = vpop.f32.mrb[0].mxu0
  %v607 = vpop.f32.mrb[0].mxu0
  %v608 = vadd.f32 %v231, %v607
  %v609 = vpop.f32.mrb[0].mxu0
  %610 = vmatprep.mubr.bf16.mxu0 %v361
  %611 = vmatmul.mubr.bf16.gmra.mrb[0].mxu0 %v189
  %v612 = vpop.f32.mrb[0].mxu0
  %v613 = vadd.f32 %v231, %v612
  %v614 = vpop.f32.mrb[0].mxu0
  %v615 = vpop.f32.mrb[0].mxu0
  %v616 = vadd.f32 %v231, %v615
  %v617 = vpop.f32.mrb[0].mxu0
  %618 = vmatprep.mubr.bf16.mxu0 %v364
  %619 = vmatmul.mubr.bf16.gmra.mrb[0].mxu0 %v191
  %v620 = vpop.f32.mrb[0].mxu0
  %v621 = vadd.f32 %v231, %v620
  %v622 = vpop.f32.mrb[0].mxu0
  %v623 = vpop.f32.mrb[0].mxu0
  %v624 = vadd.f32 %v231, %v623
  %v625 = vpop.f32.mrb[0].mxu0
  %626 = vmatprep.mubr.bf16.mxu0 %v367
  %627 = vmatmul.mubr.bf16.gmra.mrb[0].mxu0 %v193
  %v628 = vpop.f32.mrb[0].mxu0
  %v629 = vadd.f32 %v231, %v628
  %v630 = vpop.f32.mrb[0].mxu0
  %v631 = vpop.f32.mrb[0].mxu0
  %v632 = vadd.f32 %v231, %v631
  %v633 = vpop.f32.mrb[0].mxu0
  %634 = vmatprep.mubr.bf16.mxu0 %v370
  %635 = vmatmul.mubr.bf16.gmra.mrb[0].mxu0 %v195
  %v636 = vpop.f32.mrb[0].mxu0
  %v637 = vadd.f32 %v231, %v636
  %v638 = vpop.f32.mrb[0].mxu0
  %v639 = vpop.f32.mrb[0].mxu0
  %v640 = vadd.f32 %v231, %v639
  %v641 = vpop.f32.mrb[0].mxu0
  %642 = vmatprep.mubr.bf16.mxu0 %v373
  %643 = vmatmul.mubr.bf16.gmra.mrb[0].mxu0 %v197
  %v644 = vpop.f32.mrb[0].mxu0
  %v645 = vadd.f32 %v231, %v644
  %v646 = vpop.f32.mrb[0].mxu0
  %v647 = vpop.f32.mrb[0].mxu0
  %v648 = vadd.f32 %v231, %v647
  %v649 = vpop.f32.mrb[0].mxu0
  %650 = vmatprep.mubr.bf16.mxu0 %v376
  %651 = vmatmul.mubr.bf16.gmra.mrb[0].mxu0 %v199
  %v652 = vpop.f32.mrb[0].mxu0
  %v653 = vadd.f32 %v231, %v652
  %v654 = vpop.f32.mrb[0].mxu0
  %v655 = vpop.f32.mrb[0].mxu0
  %v656 = vadd.f32 %v231, %v655
  %v657 = vpop.f32.mrb[0].mxu0
  %658 = vmatprep.mubr.bf16.mxu0 %v379
  %659 = vmatmul.mubr.bf16.gmra.mrb[0].mxu0 %v201
  %v660 = vpop.f32.mrb[0].mxu0
  %v661 = vadd.f32 %v231, %v660
  %v662 = vpop.f32.mrb[0].mxu0
  %v663 = vpop.f32.mrb[0].mxu0
  %v664 = vadd.f32 %v231, %v663
  %v665 = vpop.f32.mrb[0].mxu0
  %666 = vmatprep.mubr.bf16.mxu0 %v382
  %667 = vmatmul.mubr.bf16.gmra.mrb[0].mxu0 %v203
  %v668 = vpop.f32.mrb[0].mxu0
  %v669 = vadd.f32 %v231, %v668
  %v670 = vpop.f32.mrb[0].mxu0
  %v671 = vpop.f32.mrb[0].mxu0
  %v672 = vadd.f32 %v231, %v671
  %v673 = vpop.f32.mrb[0].mxu0
  %674 = vmatprep.mubr.bf16.mxu0 %v385
  %675 = vmatmul.mubr.bf16.gmra.mrb[0].mxu0 %v205
  %v676 = vpop.f32.mrb[0].mxu0
  %v677 = vadd.f32 %v231, %v676
  %v678 = vpop.f32.mrb[0].mxu0
  %v679 = vpop.f32.mrb[0].mxu0
  %v680 = vadd.f32 %v231, %v679
  %v681 = vpop.f32.mrb[0].mxu0
  %682 = vdwg.mxu0
  %vm683 = vcmask 261120
  %684 = vst.msk [vmem:[%s3] sm:$0xff] %vm683, %v429
  %685 = vst.msk [vmem:[%s3 + $0x8] sm:$0xff] %vm683, %v432
  %686 = vst.msk [vmem:[%s3 + $0x10] sm:$0xff] %vm683, %v437
  %687 = vst.msk [vmem:[%s3 + $0x18] sm:$0xff] %vm683, %v440
  %688 = vst.msk [vmem:[%s3 + $0x20] sm:$0xff] %vm683, %v445
  %689 = vst.msk [vmem:[%s3 + $0x28] sm:$0xff] %vm683, %v448
  %690 = vst.msk [vmem:[%s3 + $0x30] sm:$0xff] %vm683, %v453
  %691 = vst.msk [vmem:[%s3 + $0x38] sm:$0xff] %vm683, %v456
  %692 = vst.msk [vmem:[%s3 + $0x40] sm:$0xff] %vm683, %v461
  %693 = vst.msk [vmem:[%s3 + $0x48] sm:$0xff] %vm683, %v464
  %694 = vst.msk [vmem:[%s3 + $0x50] sm:$0xff] %vm683, %v469
  %695 = vst.msk [vmem:[%s3 + $0x58] sm:$0xff] %vm683, %v472
  %696 = vst.msk [vmem:[%s3 + $0x60] sm:$0xff] %vm683, %v477
  %697 = vst.msk [vmem:[%s3 + $0x68] sm:$0xff] %vm683, %v480
  %698 = vst.msk [vmem:[%s3 + $0x70] sm:$0xff] %vm683, %v485
  %699 = vst.msk [vmem:[%s3 + $0x78] sm:$0xff] %vm683, %v488
  %700 = vst.msk [vmem:[%s3 + $0x80] sm:$0xff] %vm683, %v493
  %701 = vst.msk [vmem:[%s3 + $0x88] sm:$0xff] %vm683, %v496
  %702 = vst.msk [vmem:[%s3 + $0x90] sm:$0xff] %vm683, %v501
  %703 = vst.msk [vmem:[%s3 + $0x98] sm:$0xff] %vm683, %v504
  %704 = vst.msk [vmem:[%s3 + $0xa0] sm:$0xff] %vm683, %v509
  %705 = vst.msk [vmem:[%s3 + $0xa8] sm:$0xff] %vm683, %v512
  %706 = vst.msk [vmem:[%s3 + $0xb0] sm:$0xff] %vm683, %v517
  %707 = vst.msk [vmem:[%s3 + $0xb8] sm:$0xff] %vm683, %v520
  %708 = vst.msk [vmem:[%s3 + $0xc0] sm:$0xff] %vm683, %v525
  %709 = vst.msk [vmem:[%s3 + $0xc8] sm:$0xff] %vm683, %v528
  %710 = vst.msk [vmem:[%s3 + $0xd0] sm:$0xff] %vm683, %v533
  %711 = vst.msk [vmem:[%s3 + $0xd8] sm:$0xff] %vm683, %v536
  %712 = vst.msk [vmem:[%s3 + $0xe0] sm:$0xff] %vm683, %v541
  %713 = vst.msk [vmem:[%s3 + $0xe8] sm:$0xff] %vm683, %v544
  %714 = vst.msk [vmem:[%s3 + $0xf0] sm:$0xff] %vm683, %v549
  %715 = vst.msk [vmem:[%s3 + $0xf8] sm:$0xff] %vm683, %v552
  %716 = vst.msk [vmem:[%s3 + $0x100] sm:$0xff] %vm683, %v557
  %717 = vst.msk [vmem:[%s3 + $0x108] sm:$0xff] %vm683, %v560
  %718 = vst.msk [vmem:[%s3 + $0x110] sm:$0xff] %vm683, %v565
  %719 = vst.msk [vmem:[%s3 + $0x118] sm:$0xff] %vm683, %v568
  %720 = vst.msk [vmem:[%s3 + $0x120] sm:$0xff] %vm683, %v573
  %721 = vst.msk [vmem:[%s3 + $0x128] sm:$0xff] %vm683, %v576
  %722 = vst.msk [vmem:[%s3 + $0x130] sm:$0xff] %vm683, %v581
  %723 = vst.msk [vmem:[%s3 + $0x138] sm:$0xff] %vm683, %v584
  %724 = vst.msk [vmem:[%s3 + $0x140] sm:$0xff] %vm683, %v589
  %725 = vst.msk [vmem:[%s3 + $0x148] sm:$0xff] %vm683, %v592
  %726 = vst.msk [vmem:[%s3 + $0x150] sm:$0xff] %vm683, %v597
  %727 = vst.msk [vmem:[%s3 + $0x158] sm:$0xff] %vm683, %v600
  %728 = vst.msk [vmem:[%s3 + $0x160] sm:$0xff] %vm683, %v605
  %729 = vst.msk [vmem:[%s3 + $0x168] sm:$0xff] %vm683, %v608
  %730 = vst.msk [vmem:[%s3 + $0x170] sm:$0xff] %vm683, %v613
  %731 = vst.msk [vmem:[%s3 + $0x178] sm:$0xff] %vm683, %v616
  %732 = vst.msk [vmem:[%s3 + $0x180] sm:$0xff] %vm683, %v621
  %733 = vst.msk [vmem:[%s3 + $0x188] sm:$0xff] %vm683, %v624
  %734 = vst.msk [vmem:[%s3 + $0x190] sm:$0xff] %vm683, %v629
  %735 = vst.msk [vmem:[%s3 + $0x198] sm:$0xff] %vm683, %v632
  %736 = vst.msk [vmem:[%s3 + $0x1a0] sm:$0xff] %vm683, %v637
  %737 = vst.msk [vmem:[%s3 + $0x1a8] sm:$0xff] %vm683, %v640
  %738 = vst.msk [vmem:[%s3 + $0x1b0] sm:$0xff] %vm683, %v645
  %739 = vst.msk [vmem:[%s3 + $0x1b8] sm:$0xff] %vm683, %v648
  %740 = vst.msk [vmem:[%s3 + $0x1c0] sm:$0xff] %vm683, %v653
  %741 = vst.msk [vmem:[%s3 + $0x1c8] sm:$0xff] %vm683, %v656
  %742 = vst.msk [vmem:[%s3 + $0x1d0] sm:$0xff] %vm683, %v661
  %743 = vst.msk [vmem:[%s3 + $0x1d8] sm:$0xff] %vm683, %v664
  %744 = vst.msk [vmem:[%s3 + $0x1e0] sm:$0xff] %vm683, %v669
  %745 = vst.msk [vmem:[%s3 + $0x1e8] sm:$0xff] %vm683, %v672
  %746 = vst.msk [vmem:[%s3 + $0x1f0] sm:$0xff] %vm683, %v677
  %747 = vst.msk [vmem:[%s3 + $0x1f8] sm:$0xff] %vm683, %v680
  // Predicated region
  $region14: #{_fused_matmul.1} parent=0 // pred_check
    _
  $region15: #{_fused_matmul.1} parent=0 // pred_check_branch
    %749 = sbr.rel (0) target = $region17
  $region16: #{_fused_matmul.1} parent=0 // pred_region
    _
  $region17: #{_fused_matmul.1} parent=0 // pred_fallthru
    _
  // Predicated region
  $region18: #{_fused_matmul.1} parent=0 // pred_check
    _
  $region19: #{_fused_matmul.1} parent=0 // pred_check_branch
    %751 = sbr.rel (0) target = $region21
  $region20: #{_fused_matmul.1} parent=0 // pred_region
    _
  $region21: #{_fused_matmul.1} parent=0 // pred_fallthru
    _

</llo_original>
